<compile_context>
chip_gen: v7x
topology: tpu7x:2x2x1
jax: 0.10.0
libtpu: 0.0.40
codegen_flags: <defaults>
</compile_context>

<pallas_src>
import functools

import jax
import jax.numpy as jnp
from jax.experimental import pallas as pl
from jax.experimental.pallas import tpu as pltpu


def _loss_kernel(p_ref, t_ref, inter_ref, psum_ref, tsum_ref, bce_ref,
                 *, hw, tile_n, need_mask):
    """Refs: p/t (C, tile_n); outputs (C, 1) accumulators resident over k."""
    k = pl.program_id(1)

    @pl.when(k == 0)
    def _():
        inter_ref[...] = jnp.zeros_like(inter_ref)
        psum_ref[...] = jnp.zeros_like(psum_ref)
        tsum_ref[...] = jnp.zeros_like(tsum_ref)
        bce_ref[...] = jnp.zeros_like(bce_ref)

    x = p_ref[...].astype(jnp.float32)          # (C, tile_n) logits
    t = t_ref[...].astype(jnp.float32)          # (C, tile_n) targets in {0,1}

    if need_mask:
        # Global lane index; zero out the padded tail of the last tile.
        col = k * tile_n + jax.lax.broadcasted_iota(jnp.int32, x.shape, 1)
        valid = col < hw
        mf = valid.astype(jnp.float32)
        x = jnp.where(valid, x, 0.0)            # guard against garbage padding
        t = jnp.where(valid, t, 0.0)

    # Shared exp(-|x|) feeds both the sigmoid and the stable BCE log term.
    e = jnp.exp(-jnp.abs(x))
    s = jnp.where(x >= 0.0, 1.0, e) * pl.reciprocal(1.0 + e, approx=True)
    bce = jnp.maximum(x, 0.0) - x * t + jnp.log1p(e)

    if need_mask:
        s = s * mf                               # masked sigmoid(0)=0.5 -> 0
        bce = bce * mf                           # masked BCE term log(2) -> 0

    # Per-class lane-axis reductions (t already 0 on masked lanes).
    inter_ref[...] += jnp.sum(s * t, axis=-1, keepdims=True)
    psum_ref[...] += jnp.sum(s, axis=-1, keepdims=True)
    tsum_ref[...] += jnp.sum(t, axis=-1, keepdims=True)
    bce_ref[...] += jnp.sum(bce, axis=-1, keepdims=True)


def loss_forward(pred, target, *, smooth=1.0, max_tile_n=8192):
    """pred: (B, C, H, W) float logits; target: (B, C, H, W) {0,1} (any dtype).

    Returns (dice_loss, ce_loss) matching the PyTorch `Loss` module.
    """
    assert pred.shape == target.shape
    B, C, H, W = pred.shape
    HW = H * W

    # Free reshapes — no HBM data movement (unlike the old NCHW->(C,N) transpose).
    p3 = pred.reshape(B, C, HW)
    t3 = target.reshape(B, C, HW)

    # Tile selection: full HW if it fits the cap (exempt from the 128 rule),
    # otherwise a 128-multiple with a masked remainder tile.
    tile_n = min(HW, max_tile_n)
    if tile_n != HW:
        tile_n = max((tile_n // 128) * 128, 128)
    grid = (B, pl.cdiv(HW, tile_n))
    need_mask = (HW % tile_n) != 0

    in_spec = pl.BlockSpec((pl.Squeezed(), C, tile_n), lambda b, k: (b, 0, k))
    out_spec = pl.BlockSpec((pl.Squeezed(), C, 1), lambda b, k: (b, 0, 0))

    out_shapes = (
        jax.ShapeDtypeStruct((B, C, 1), jnp.float32),   # sum(sigmoid(x) * t)
        jax.ShapeDtypeStruct((B, C, 1), jnp.float32),   # sum(sigmoid(x))
        jax.ShapeDtypeStruct((B, C, 1), jnp.float32),   # sum(t)
        jax.ShapeDtypeStruct((B, C, 1), jnp.float32),   # sum(BCE elementwise)
    )

    n_elem = B * C * HW
    cost = pl.CostEstimate(
        flops=10 * n_elem,
        transcendentals=3 * n_elem,
        bytes_accessed=int(pred.size * pred.dtype.itemsize
                           + target.size * target.dtype.itemsize
                           + 4 * B * C * 4),
    )

    kernel = functools.partial(_loss_kernel, hw=HW, tile_n=tile_n,
                               need_mask=need_mask)

    inter_b, psum_b, tsum_b, bce_b = pl.pallas_call(
        kernel,
        out_shape=out_shapes,
        grid_spec=pltpu.PrefetchScalarGridSpec(
            num_scalar_prefetch=0,
            grid=grid,
            in_specs=[in_spec, in_spec],
            out_specs=[out_spec, out_spec, out_spec, out_spec],
        ),
        compiler_params=pltpu.CompilerParams(
            # batch axis is embarrassingly parallel (per-batch partial outputs)
            # -> v7x megacore splits it; reduction axis (k) stays "arbitrary".
            dimension_semantics=("parallel", "arbitrary"),
        ),
        cost_estimate=cost,
    )(p3, t3)

    # Cheap scalar epilogue: combine per-batch partials.
    inter = jnp.sum(inter_b[..., 0], axis=0)     # (C,)
    psum = jnp.sum(psum_b[..., 0], axis=0)       # (C,)
    tsum = jnp.sum(tsum_b[..., 0], axis=0)       # (C,)
    dice_per_class = 1.0 - (2.0 * inter + smooth) / (psum + tsum + smooth)
    dice_loss = jnp.mean(dice_per_class)
    ce_loss = jnp.sum(bce_b) / jnp.float32(n_elem)
    return dice_loss, ce_loss


def _reference(pred, target, smooth=1.0):
    """Pure-JAX reference for sanity checking."""
    p = jax.nn.sigmoid(pred.astype(jnp.float32))
    t = target.astype(jnp.float32)
    inter = jnp.sum(p * t, axis=(0, 2, 3))
    denom = jnp.sum(p, axis=(0, 2, 3)) + jnp.sum(t, axis=(0, 2, 3))
    dice_loss = jnp.mean(1.0 - (2.0 * inter + smooth) / (denom + smooth))
    x = pred.astype(jnp.float32)
    ce = jnp.mean(jnp.maximum(x, 0.0) - x * t + jnp.log1p(jnp.exp(-jnp.abs(x))))
    return dice_loss, ce


if __name__ == "__main__":
    key = jax.random.PRNGKey(0)
    k1, k2 = jax.random.split(key)
    B, C, H, W = 2, 4, 16, 16
    pred = jax.random.normal(k1, (B, C, H, W), dtype=jnp.float32)
    target_f32 = jax.random.bernoulli(k2, 0.5, (B, C, H, W)).astype(jnp.float32)
    # Targets are exactly {0,1}: pass them narrow (bf16) to halve their HBM read.
    target_bf16 = target_f32.astype(jnp.bfloat16)

    dice_loss, ce_loss = loss_forward(pred, target_bf16)
    jax.block_until_ready((dice_loss, ce_loss))

    dice_ref, ce_ref = _reference(pred, target_f32)
    # Dice uses the approx EUP reciprocal inside the kernel -> looser tolerance.
    assert jnp.allclose(dice_loss, dice_ref, atol=1e-3, rtol=1e-3), (dice_loss, dice_ref)
    assert jnp.allclose(ce_loss, ce_ref, atol=1e-5, rtol=1e-5), (ce_loss, ce_ref)

    print("KERNEL_OK")
</pallas_src>

<mosaic_0001>
module attributes {stable_mosaic.version = 11 : i64} {
  func.func @_loss_kernel(%arg0: i32, %arg1: i32, %arg2: memref<1x4x256xf32, #tpu.memory_space<vmem>>, %arg3: memref<1x4x256xbf16, #tpu.memory_space<vmem>>, %arg4: memref<1x4x1xf32, #tpu.memory_space<vmem>>, %arg5: memref<1x4x1xf32, #tpu.memory_space<vmem>>, %arg6: memref<1x4x1xf32, #tpu.memory_space<vmem>>, %arg7: memref<1x4x1xf32, #tpu.memory_space<vmem>>) attributes {dimension_semantics = [#tpu.dimension_semantics<parallel>, #tpu.dimension_semantics<arbitrary>], iteration_bounds = array<i64: 2, 1>, scalar_prefetch = 0 : i64, scratch_operands = 0 : i64, tpu.core_type = #tpu.core_type<tc>, window_params = [{transform_indices = @transform_0, window_bounds = array<i64: 1, 4, 256>}, {transform_indices = @transform_1, window_bounds = array<i64: 1, 4, 256>}, {transform_indices = @transform_2, window_bounds = array<i64: 1, 4, 1>}, {transform_indices = @transform_3, window_bounds = array<i64: 1, 4, 1>}, {transform_indices = @transform_4, window_bounds = array<i64: 1, 4, 1>}, {transform_indices = @transform_5, window_bounds = array<i64: 1, 4, 1>}]} {
    %c0_i32 = arith.constant 0 : i32
    %0 = arith.cmpi eq, %arg1, %c0_i32 : i32
    %1 = arith.extui %0 : i1 to i32
    %c0_i32_0 = arith.constant 0 : i32
    %2 = arith.cmpi ne, %1, %c0_i32_0 : i32
    scf.if %2 {
      %cst_38 = arith.constant 0.000000e+00 : f32
      %59 = vector.broadcast %cst_38 : f32 to vector<4x1xf32>
      %c0_39 = arith.constant 0 : index
      %c0_40 = arith.constant 0 : index
      %c0_41 = arith.constant 0 : index
      %60 = vector.load %arg4[%c0_39, %c0_40, %c0_41] : memref<1x4x1xf32, #tpu.memory_space<vmem>>, vector<1x4x1xf32>
      %61 = vector.shape_cast %60 : vector<1x4x1xf32> to vector<4x1xf32>
      %62 = vector.shape_cast %59 : vector<4x1xf32> to vector<1x4x1xf32>
      tpu.vector_store %arg4[%c0_39, %c0_40, %c0_41], %62 {strides = array<i32>} : memref<1x4x1xf32, #tpu.memory_space<vmem>>, vector<1x4x1xf32>,
      %cst_42 = arith.constant 0.000000e+00 : f32
      %63 = vector.broadcast %cst_42 : f32 to vector<4x1xf32>
      %c0_43 = arith.constant 0 : index
      %c0_44 = arith.constant 0 : index
      %c0_45 = arith.constant 0 : index
      %64 = vector.load %arg5[%c0_43, %c0_44, %c0_45] : memref<1x4x1xf32, #tpu.memory_space<vmem>>, vector<1x4x1xf32>
      %65 = vector.shape_cast %64 : vector<1x4x1xf32> to vector<4x1xf32>
      %66 = vector.shape_cast %63 : vector<4x1xf32> to vector<1x4x1xf32>
      tpu.vector_store %arg5[%c0_43, %c0_44, %c0_45], %66 {strides = array<i32>} : memref<1x4x1xf32, #tpu.memory_space<vmem>>, vector<1x4x1xf32>,
      %cst_46 = arith.constant 0.000000e+00 : f32
      %67 = vector.broadcast %cst_46 : f32 to vector<4x1xf32>
      %c0_47 = arith.constant 0 : index
      %c0_48 = arith.constant 0 : index
      %c0_49 = arith.constant 0 : index
      %68 = vector.load %arg6[%c0_47, %c0_48, %c0_49] : memref<1x4x1xf32, #tpu.memory_space<vmem>>, vector<1x4x1xf32>
      %69 = vector.shape_cast %68 : vector<1x4x1xf32> to vector<4x1xf32>
      %70 = vector.shape_cast %67 : vector<4x1xf32> to vector<1x4x1xf32>
      tpu.vector_store %arg6[%c0_47, %c0_48, %c0_49], %70 {strides = array<i32>} : memref<1x4x1xf32, #tpu.memory_space<vmem>>, vector<1x4x1xf32>,
      %cst_50 = arith.constant 0.000000e+00 : f32
      %71 = vector.broadcast %cst_50 : f32 to vector<4x1xf32>
      %c0_51 = arith.constant 0 : index
      %c0_52 = arith.constant 0 : index
      %c0_53 = arith.constant 0 : index
      %72 = vector.load %arg7[%c0_51, %c0_52, %c0_53] : memref<1x4x1xf32, #tpu.memory_space<vmem>>, vector<1x4x1xf32>
      %73 = vector.shape_cast %72 : vector<1x4x1xf32> to vector<4x1xf32>
      %74 = vector.shape_cast %71 : vector<4x1xf32> to vector<1x4x1xf32>
      tpu.vector_store %arg7[%c0_51, %c0_52, %c0_53], %74 {strides = array<i32>} : memref<1x4x1xf32, #tpu.memory_space<vmem>>, vector<1x4x1xf32>,
    } else {
    }
    %c0 = arith.constant 0 : index
    %c0_1 = arith.constant 0 : index
    %c0_2 = arith.constant 0 : index
    %3 = vector.load %arg2[%c0, %c0_1, %c0_2] : memref<1x4x256xf32, #tpu.memory_space<vmem>>, vector<1x4x256xf32>
    %4 = vector.shape_cast %3 : vector<1x4x256xf32> to vector<4x256xf32>
    %c0_3 = arith.constant 0 : index
    %c0_4 = arith.constant 0 : index
    %c0_5 = arith.constant 0 : index
    %5 = vector.load %arg3[%c0_3, %c0_4, %c0_5] : memref<1x4x256xbf16, #tpu.memory_space<vmem>>, vector<1x4x256xbf16>
    %6 = vector.shape_cast %5 : vector<1x4x256xbf16> to vector<4x256xbf16>
    %7 = arith.extf %6 : vector<4x256xbf16> to vector<4x256xf32>
    %8 = math.absf %4 : vector<4x256xf32>
    %cst = arith.constant 0.000000e+00 : f32
    %9 = vector.broadcast %cst : f32 to vector<4x256xf32>
    %10 = arith.subf %9, %8 : vector<4x256xf32>
    %11 = math.exp %10 : vector<4x256xf32>
    %cst_6 = arith.constant 0.000000e+00 : f32
    %12 = vector.broadcast %cst_6 : f32 to vector<4x256xf32>
    %13 = arith.cmpf oge, %4, %12 : vector<4x256xf32>
    %cst_7 = arith.constant 1.000000e+00 : f32
    %14 = vector.broadcast %cst_7 : f32 to vector<4x256xf32>
    %15 = arith.select %13, %14, %11 : vector<4x256xi1>, vector<4x256xf32>
    %cst_8 = arith.constant 1.000000e+00 : f32
    %16 = vector.broadcast %cst_8 : f32 to vector<4x256xf32>
    %17 = arith.addf %16, %11 : vector<4x256xf32>
    %18 = tpu.reciprocal %17 {approx = true} : vector<4x256xf32> -> vector<4x256xf32>
    %19 = arith.mulf %15, %18 : vector<4x256xf32>
    %cst_9 = arith.constant 0.000000e+00 : f32
    %20 = vector.broadcast %cst_9 : f32 to vector<4x256xf32>
    %21 = arith.maximumf %4, %20 : vector<4x256xf32>
    %22 = arith.mulf %4, %7 : vector<4x256xf32>
    %23 = arith.subf %21, %22 : vector<4x256xf32>
    %24 = math.log1p %11 : vector<4x256xf32>
    %25 = arith.addf %23, %24 : vector<4x256xf32>
    %c0_10 = arith.constant 0 : index
    %c0_11 = arith.constant 0 : index
    %c0_12 = arith.constant 0 : index
    %26 = vector.load %arg4[%c0_10, %c0_11, %c0_12] : memref<1x4x1xf32, #tpu.memory_space<vmem>>, vector<1x4x1xf32>
    %27 = vector.shape_cast %26 : vector<1x4x1xf32> to vector<4x1xf32>
    %28 = arith.mulf %19, %7 : vector<4x256xf32>
    %cst_13 = arith.constant dense<0.000000e+00> : vector<4xf32>
    %29 = vector.multi_reduction <add>, %28, %cst_13 [1] : vector<4x256xf32> to vector<4xf32>
    %30 = vector.shape_cast %29 : vector<4xf32> to vector<4x1xf32>
    %31 = arith.addf %27, %30 : vector<4x1xf32>
    %c0_14 = arith.constant 0 : index
    %c0_15 = arith.constant 0 : index
    %c0_16 = arith.constant 0 : index
    %32 = vector.load %arg4[%c0_14, %c0_15, %c0_16] : memref<1x4x1xf32, #tpu.memory_space<vmem>>, vector<1x4x1xf32>
    %33 = vector.shape_cast %32 : vector<1x4x1xf32> to vector<4x1xf32>
    %34 = vector.shape_cast %31 : vector<4x1xf32> to vector<1x4x1xf32>
    tpu.vector_store %arg4[%c0_14, %c0_15, %c0_16], %34 {strides = array<i32>} : memref<1x4x1xf32, #tpu.memory_space<vmem>>, vector<1x4x1xf32>,
    %c0_17 = arith.constant 0 : index
    %c0_18 = arith.constant 0 : index
    %c0_19 = arith.constant 0 : index
    %35 = vector.load %arg5[%c0_17, %c0_18, %c0_19] : memref<1x4x1xf32, #tpu.memory_space<vmem>>, vector<1x4x1xf32>
    %36 = vector.shape_cast %35 : vector<1x4x1xf32> to vector<4x1xf32>
    %cst_20 = arith.constant dense<0.000000e+00> : vector<4xf32>
    %37 = vector.multi_reduction <add>, %19, %cst_20 [1] : vector<4x256xf32> to vector<4xf32>
    %38 = vector.shape_cast %37 : vector<4xf32> to vector<4x1xf32>
    %39 = arith.addf %36, %38 : vector<4x1xf32>
    %c0_21 = arith.constant 0 : index
    %c0_22 = arith.constant 0 : index
    %c0_23 = arith.constant 0 : index
    %40 = vector.load %arg5[%c0_21, %c0_22, %c0_23] : memref<1x4x1xf32, #tpu.memory_space<vmem>>, vector<1x4x1xf32>
    %41 = vector.shape_cast %40 : vector<1x4x1xf32> to vector<4x1xf32>
    %42 = vector.shape_cast %39 : vector<4x1xf32> to vector<1x4x1xf32>
    tpu.vector_store %arg5[%c0_21, %c0_22, %c0_23], %42 {strides = array<i32>} : memref<1x4x1xf32, #tpu.memory_space<vmem>>, vector<1x4x1xf32>,
    %c0_24 = arith.constant 0 : index
    %c0_25 = arith.constant 0 : index
    %c0_26 = arith.constant 0 : index
    %43 = vector.load %arg6[%c0_24, %c0_25, %c0_26] : memref<1x4x1xf32, #tpu.memory_space<vmem>>, vector<1x4x1xf32>
    %44 = vector.shape_cast %43 : vector<1x4x1xf32> to vector<4x1xf32>
    %cst_27 = arith.constant dense<0.000000e+00> : vector<4xf32>
    %45 = vector.multi_reduction <add>, %7, %cst_27 [1] : vector<4x256xf32> to vector<4xf32>
    %46 = vector.shape_cast %45 : vector<4xf32> to vector<4x1xf32>
    %47 = arith.addf %44, %46 : vector<4x1xf32>
    %c0_28 = arith.constant 0 : index
    %c0_29 = arith.constant 0 : index
    %c0_30 = arith.constant 0 : index
    %48 = vector.load %arg6[%c0_28, %c0_29, %c0_30] : memref<1x4x1xf32, #tpu.memory_space<vmem>>, vector<1x4x1xf32>
    %49 = vector.shape_cast %48 : vector<1x4x1xf32> to vector<4x1xf32>
    %50 = vector.shape_cast %47 : vector<4x1xf32> to vector<1x4x1xf32>
    tpu.vector_store %arg6[%c0_28, %c0_29, %c0_30], %50 {strides = array<i32>} : memref<1x4x1xf32, #tpu.memory_space<vmem>>, vector<1x4x1xf32>,
    %c0_31 = arith.constant 0 : index
    %c0_32 = arith.constant 0 : index
    %c0_33 = arith.constant 0 : index
    %51 = vector.load %arg7[%c0_31, %c0_32, %c0_33] : memref<1x4x1xf32, #tpu.memory_space<vmem>>, vector<1x4x1xf32>
    %52 = vector.shape_cast %51 : vector<1x4x1xf32> to vector<4x1xf32>
    %cst_34 = arith.constant dense<0.000000e+00> : vector<4xf32>
    %53 = vector.multi_reduction <add>, %25, %cst_34 [1] : vector<4x256xf32> to vector<4xf32>
    %54 = vector.shape_cast %53 : vector<4xf32> to vector<4x1xf32>
    %55 = arith.addf %52, %54 : vector<4x1xf32>
    %c0_35 = arith.constant 0 : index
    %c0_36 = arith.constant 0 : index
    %c0_37 = arith.constant 0 : index
    %56 = vector.load %arg7[%c0_35, %c0_36, %c0_37] : memref<1x4x1xf32, #tpu.memory_space<vmem>>, vector<1x4x1xf32>
    %57 = vector.shape_cast %56 : vector<1x4x1xf32> to vector<4x1xf32>
    %58 = vector.shape_cast %55 : vector<4x1xf32> to vector<1x4x1xf32>
    tpu.vector_store %arg7[%c0_35, %c0_36, %c0_37], %58 {strides = array<i32>} : memref<1x4x1xf32, #tpu.memory_space<vmem>>, vector<1x4x1xf32>,
    return
  }
  func.func @transform_0(%arg0: i32, %arg1: i32) -> (i32, i32, i32) {
    %c0_i32 = arith.constant 0 : i32
    %c0_i32_0 = arith.constant 0 : i32
    return %arg0, %c0_i32, %arg1 : i32, i32, i32
  }
  func.func @transform_1(%arg0: i32, %arg1: i32) -> (i32, i32, i32) {
    %c0_i32 = arith.constant 0 : i32
    %c0_i32_0 = arith.constant 0 : i32
    return %arg0, %c0_i32, %arg1 : i32, i32, i32
  }
  func.func @transform_2(%arg0: i32, %arg1: i32) -> (i32, i32, i32) {
    %c0_i32 = arith.constant 0 : i32
    %c0_i32_0 = arith.constant 0 : i32
    %c0_i32_1 = arith.constant 0 : i32
    return %arg0, %c0_i32, %c0_i32_0 : i32, i32, i32
  }
  func.func @transform_3(%arg0: i32, %arg1: i32) -> (i32, i32, i32) {
    %c0_i32 = arith.constant 0 : i32
    %c0_i32_0 = arith.constant 0 : i32
    %c0_i32_1 = arith.constant 0 : i32
    return %arg0, %c0_i32, %c0_i32_0 : i32, i32, i32
  }
  func.func @transform_4(%arg0: i32, %arg1: i32) -> (i32, i32, i32) {
    %c0_i32 = arith.constant 0 : i32
    %c0_i32_0 = arith.constant 0 : i32
    %c0_i32_1 = arith.constant 0 : i32
    return %arg0, %c0_i32, %c0_i32_0 : i32, i32, i32
  }
  func.func @transform_5(%arg0: i32, %arg1: i32) -> (i32, i32, i32) {
    %c0_i32 = arith.constant 0 : i32
    %c0_i32_0 = arith.constant 0 : i32
    %c0_i32_1 = arith.constant 0 : i32
    return %arg0, %c0_i32, %c0_i32_0 : i32, i32, i32
  }
}

</mosaic_0001>

<llo_original>
// kernel: tpu_custom_call.1
$region0: #{tpu_custom_call.1}
  #allocation0 [shape = 'u32[]', space=smem, size = 0x4, offset = 0x4, fixed_abs, tag = 'smem constant byte address 0x4 - core index']
  #allocation1 [shape = 'u32[144,128]{1,0:T(1,128)}', space=vmem, size = 0x12000, scoped, tag = 'internal scratch']
  %s0 = inlined_call_operand.hbm [shape: f32[2,4,256], index: 0, kind: input, shape index: {}]
  %s1 = inlined_call_operand.hbm [shape: bf16[2,4,256], index: 1, kind: input, shape index: {}]
  %s2 = inlined_call_operand.vmem [shape: f32[2,4,1], index: 2, kind: output, shape index: {0}]
  %s3 = inlined_call_operand.vmem [shape: f32[2,4,1], index: 3, kind: output, shape index: {1}]
  %s4 = inlined_call_operand.vmem [shape: f32[2,4,1], index: 4, kind: output, shape index: {2}]
  %s5 = inlined_call_operand.vmem [shape: f32[2,4,1], index: 5, kind: output, shape index: {3}]
  %6 = xla_tuple %s2, %s3, %s4, %s5
  %s7 = sld [smem:[#allocation0]]
  $region77: #{tpu_custom_call.1} parent=0
    _
  %s9 = ssub.s32 1, %s7
  %s10 = scalar_select 0, %s9, %s7
  $region1: #{tpu_custom_call.1} parent=0
    #allocation2 [shape = 'u8[8192]{0}', space=vmem, size = 0x2000, scoped, tag = 'input window, operand 0']
    #allocation3 [shape = 's32[2]{0}', space=sflag, size = 0x8, scoped, tag = 'scoped memory for tpu_custom_call.1']
    #allocation4 [shape = 'u8[4096]{0}', space=vmem, size = 0x1000, scoped, tag = 'input window, operand 1']
    #allocation5 [shape = 's32[2]{0}', space=sflag, size = 0x8, scoped, tag = 'scoped memory for tpu_custom_call.1']
    %11 = vsyncpa [#allocation3], 0
    %s12 = scalar_lea.sflag [#allocation3], 1
    %13 = vsyncpa %s12, 0
    %14 = vsyncpa [#allocation5], 0
    %s15 = scalar_lea.sflag [#allocation5], 1
    %16 = vsyncpa %s15, 0
    loop: start=0, step=1, limit=4
    $region2: #{tpu_custom_call.1} parent=1 // loop_pre_header
      _
    $region3: #{tpu_custom_call.1} parent=1 // loop_header
      %s18 = sphi 0, %s22
      %p19 = scmp.ge.s32.totalorder %s18, 4
      %s25 = sphi 0, %s37
      %s26 = sphi 0, %s33
      %s27 = sphi 0, %s25
      %s28 = sphi 0, %s26
      %s29 = sphi 0, %s27
      %s30 = sphi 0, %s28
      %s42 = sphi 0, %s44
      %s45 = sphi 0, %s42
      %s46 = sphi 0, %s45
      %s62 = sphi 0, %s46
      %s70 = sphi 0, %s72
      %s73 = sphi 0, %s70
      %s74 = sphi 0, %s73
      %s90 = sphi 0, %s74
      %s96 = sphi 0, %s98
      %s99 = sphi 0, %s96
      %s100 = sphi 0, %s99
      %s116 = sphi 0, %s100
      %s122 = sphi 0, %s124
      %s125 = sphi 0, %s122
      %s126 = sphi 0, %s125
      %s142 = sphi 0, %s126
      %s148 = sphi 0, %s150
      %s151 = sphi 0, %s148
      %s152 = sphi 0, %s151
      %s168 = sphi 0, %s152
      %s174 = sphi 0, %s176
      %s177 = sphi 0, %s174
      %s178 = sphi 0, %s177
      %s194 = sphi 0, %s178
    $region4: #{tpu_custom_call.1} parent=1 // loop_header_branch
      %21 = sbr.rel (%p19) target = $region8
    $region5: #{tpu_custom_call.1} parent=1 // loop_body
      %s23 = ssub.s32 %s18, 1
      %s24 = ssub.s32 %s18, 2
      %s31 = sadd.s32 1, %s26
      %p32 = scmp.ge.s32.totalorder %s31, 1
      %s33 = scalar_select %p32, 0, %s31
      %s34 = sadd.s32 1, %s25
      %s35 = scalar_select %p32, %s34, %s25
      %p36 = scmp.ge.s32.totalorder %s35, 2
      %s37 = scalar_select %p36, 0, %s35
      %s38 = ssub.s32 %s25, %s37
      %s39 = ssub.s32 %s26, %s33
      %s40 = sor.u32 %s38, %s39
      %p41 = scmp.eq.s32.totalorder %s40, 0
      %s43 = sadd.s32 %s42, 1
      %s44 = scalar_select %p41, %s42, %s43
      %p47 = pneg %p41
      %p48 = scmp.eq.s32.totalorder %s18, 1
      %p49 = por %p47, %p48
      %p50 = scmp.ne.s32.totalorder %s42, %s45
      %p51 = scmp.eq.s32.totalorder %s18, 0
      %p52 = por %p50, %p51
      %p53 = scmp.ne.s32.totalorder %s42, %s45
      %p54 = scmp.eq.s32.totalorder %s23, 1
      %p55 = por %p53, %p54
      %p56 = scmp.ne.s32.totalorder %s45, %s46
      %p57 = scmp.eq.s32.totalorder %s23, 0
      %p58 = por %p56, %p57
      %p59 = scmp.ne.s32.totalorder %s45, %s46
      %p60 = scmp.eq.s32.totalorder %s24, 1
      %p61 = por %p59, %p60
      %p63 = scmp.ne.s32.totalorder %s46, %s62
      %p64 = scmp.eq.s32.totalorder %s24, 0
      %p65 = por %p63, %p64
      %s66 = ssub.s32 %s25, %s37
      %s67 = ssub.s32 %s26, %s33
      %s68 = sor.u32 %s66, %s67
      %p69 = scmp.eq.s32.totalorder %s68, 0
      %s71 = sadd.s32 %s70, 1
      %s72 = scalar_select %p69, %s70, %s71
      %p75 = pneg %p69
      %p76 = scmp.eq.s32.totalorder %s18, 1
      %p77 = por %p75, %p76
      %p78 = scmp.ne.s32.totalorder %s70, %s73
      %p79 = scmp.eq.s32.totalorder %s18, 0
      %p80 = por %p78, %p79
      %p81 = scmp.ne.s32.totalorder %s70, %s73
      %p82 = scmp.eq.s32.totalorder %s23, 1
      %p83 = por %p81, %p82
      %p84 = scmp.ne.s32.totalorder %s73, %s74
      %p85 = scmp.eq.s32.totalorder %s23, 0
      %p86 = por %p84, %p85
      %p87 = scmp.ne.s32.totalorder %s73, %s74
      %p88 = scmp.eq.s32.totalorder %s24, 1
      %p89 = por %p87, %p88
      %p91 = scmp.ne.s32.totalorder %s74, %s90
      %p92 = scmp.eq.s32.totalorder %s24, 0
      %p93 = por %p91, %p92
      %s94 = ssub.s32 %s25, %s37
      %p95 = scmp.eq.s32.totalorder %s94, 0
      %s97 = sadd.s32 %s96, 1
      %s98 = scalar_select %p95, %s96, %s97
      %p101 = pneg %p95
      %p102 = scmp.eq.s32.totalorder %s18, 1
      %p103 = por %p101, %p102
      %p104 = scmp.ne.s32.totalorder %s96, %s99
      %p105 = scmp.eq.s32.totalorder %s18, 0
      %p106 = por %p104, %p105
      %p107 = scmp.ne.s32.totalorder %s96, %s99
      %p108 = scmp.eq.s32.totalorder %s23, 1
      %p109 = por %p107, %p108
      %p110 = scmp.ne.s32.totalorder %s99, %s100
      %p111 = scmp.eq.s32.totalorder %s23, 0
      %p112 = por %p110, %p111
      %p113 = scmp.ne.s32.totalorder %s99, %s100
      %p114 = scmp.eq.s32.totalorder %s24, 1
      %p115 = por %p113, %p114
      %p117 = scmp.ne.s32.totalorder %s100, %s116
      %p118 = scmp.eq.s32.totalorder %s24, 0
      %p119 = por %p117, %p118
      %s120 = ssub.s32 %s25, %s37
      %p121 = scmp.eq.s32.totalorder %s120, 0
      %s123 = sadd.s32 %s122, 1
      %s124 = scalar_select %p121, %s122, %s123
      %p127 = pneg %p121
      %p128 = scmp.eq.s32.totalorder %s18, 1
      %p129 = por %p127, %p128
      %p130 = scmp.ne.s32.totalorder %s122, %s125
      %p131 = scmp.eq.s32.totalorder %s18, 0
      %p132 = por %p130, %p131
      %p133 = scmp.ne.s32.totalorder %s122, %s125
      %p134 = scmp.eq.s32.totalorder %s23, 1
      %p135 = por %p133, %p134
      %p136 = scmp.ne.s32.totalorder %s125, %s126
      %p137 = scmp.eq.s32.totalorder %s23, 0
      %p138 = por %p136, %p137
      %p139 = scmp.ne.s32.totalorder %s125, %s126
      %p140 = scmp.eq.s32.totalorder %s24, 1
      %p141 = por %p139, %p140
      %p143 = scmp.ne.s32.totalorder %s126, %s142
      %p144 = scmp.eq.s32.totalorder %s24, 0
      %p145 = por %p143, %p144
      %s146 = ssub.s32 %s25, %s37
      %p147 = scmp.eq.s32.totalorder %s146, 0
      %s149 = sadd.s32 %s148, 1
      %s150 = scalar_select %p147, %s148, %s149
      %p153 = pneg %p147
      %p154 = scmp.eq.s32.totalorder %s18, 1
      %p155 = por %p153, %p154
      %p156 = scmp.ne.s32.totalorder %s148, %s151
      %p157 = scmp.eq.s32.totalorder %s18, 0
      %p158 = por %p156, %p157
      %p159 = scmp.ne.s32.totalorder %s148, %s151
      %p160 = scmp.eq.s32.totalorder %s23, 1
      %p161 = por %p159, %p160
      %p162 = scmp.ne.s32.totalorder %s151, %s152
      %p163 = scmp.eq.s32.totalorder %s23, 0
      %p164 = por %p162, %p163
      %p165 = scmp.ne.s32.totalorder %s151, %s152
      %p166 = scmp.eq.s32.totalorder %s24, 1
      %p167 = por %p165, %p166
      %p169 = scmp.ne.s32.totalorder %s152, %s168
      %p170 = scmp.eq.s32.totalorder %s24, 0
      %p171 = por %p169, %p170
      %s172 = ssub.s32 %s25, %s37
      %p173 = scmp.eq.s32.totalorder %s172, 0
      %s175 = sadd.s32 %s174, 1
      %s176 = scalar_select %p173, %s174, %s175
      %p179 = pneg %p173
      %p180 = scmp.eq.s32.totalorder %s18, 1
      %p181 = por %p179, %p180
      %p182 = scmp.ne.s32.totalorder %s174, %s177
      %p183 = scmp.eq.s32.totalorder %s18, 0
      %p184 = por %p182, %p183
      %p185 = scmp.ne.s32.totalorder %s174, %s177
      %p186 = scmp.eq.s32.totalorder %s23, 1
      %p187 = por %p185, %p186
      %p188 = scmp.ne.s32.totalorder %s177, %s178
      %p189 = scmp.eq.s32.totalorder %s23, 0
      %p190 = por %p188, %p189
      %p191 = scmp.ne.s32.totalorder %s177, %s178
      %p192 = scmp.eq.s32.totalorder %s24, 1
      %p193 = por %p191, %p192
      %p195 = scmp.ne.s32.totalorder %s178, %s194
      %p196 = scmp.eq.s32.totalorder %s24, 0
      %p197 = por %p195, %p196
      %p198 = scmp.le.s32.totalorder 1, %s18
      %p199 = scmp.lt.s32.totalorder %s18, 3
      %p200 = pnand %p198, %p199
      %p201 = pneg %p200
      // Predicated region
      $region9: #{tpu_custom_call.1} parent=5 // pred_check
        _
      $region10: #{tpu_custom_call.1} parent=5 // pred_check_branch
        %203 = sbr.rel (%p200) target = $region12
      $region11: #{tpu_custom_call.1} parent=5 // pred_region
        %s204 = ssub.s32 %s18, 1
      $region12: #{tpu_custom_call.1} parent=5 // pred_fallthru
        _
      %p205 = scmp.lt.s32.totalorder %s18, 2
      // Predicated region
      $region13: #{tpu_custom_call.1} parent=5 // pred_check
        %p206 = pneg %p205
      $region14: #{tpu_custom_call.1} parent=5 // pred_check_branch
        %208 = sbr.rel (%p206) target = $region16
      $region15: #{tpu_custom_call.1} parent=5 // pred_region
        // Predicated region
        $region17: #{tpu_custom_call.1} parent=15 // pred_check
          %p209 = pneg %p52
        $region18: #{tpu_custom_call.1} parent=15 // pred_check_branch
          %211 = sbr.rel (%p209) target = $region20
        $region19: #{tpu_custom_call.1} parent=15 // pred_region
          %s212 = sand.u32 %s42, 1
          %s213 = scalar_lea.sflag [#allocation3], %s212
          %s214 = sand.u32 %s42, 1
          %s215 = smul.addr %s214, 8
          %s216 = scalar_lea.vmem [#allocation2], %s215
          %s217 = smul.u32 2, %s26
          %s219 = ssub.s32 128, 128
          %220 = vsyncadd %s213, %s219
          %s221 = smul.addr %s25, 2
          %s222 = sadd.s32 %s217, %s221
          %s223 = smul.addr %s222, 64
          %s224 = scalar_lea.hbm %s0, %s223
          %s226 = sshll.u32 %s216, 4
          %s227 = int_to_ptr.vmem [resolvable:$true] %s226
          %229 = dma.hbm_to_vmem [thread:$0]  %s224, 128, %s227, %s213
        $region20: #{tpu_custom_call.1} parent=15 // pred_fallthru
          _
        // Predicated region
        $region21: #{tpu_custom_call.1} parent=15 // pred_check
          %p230 = pneg %p80
        $region22: #{tpu_custom_call.1} parent=15 // pred_check_branch
          %232 = sbr.rel (%p230) target = $region24
        $region23: #{tpu_custom_call.1} parent=15 // pred_region
          %s233 = sand.u32 %s70, 1
          %s234 = scalar_lea.sflag [#allocation5], %s233
          %s235 = sand.u32 %s70, 1
          %s236 = smul.addr %s235, 4
          %s237 = scalar_lea.vmem [#allocation4], %s236
          %s238 = smul.u32 2, %s26
          %s240 = ssub.s32 64, 64
          %241 = vsyncadd %s234, %s240
          %s242 = smul.addr %s25, 2
          %s243 = sadd.s32 %s238, %s242
          %s244 = smul.addr %s243, 32
          %s245 = scalar_lea.hbm %s1, %s244
          %s247 = sshll.u32 %s237, 4
          %s248 = int_to_ptr.vmem [resolvable:$true] %s247
          %250 = dma.hbm_to_vmem [thread:$0]  %s245, 64, %s248, %s234
        $region24: #{tpu_custom_call.1} parent=15 // pred_fallthru
          _
      $region16: #{tpu_custom_call.1} parent=5 // pred_fallthru
        _
      %p251 = scmp.le.s32.totalorder 1, %s18
      %p252 = scmp.lt.s32.totalorder %s18, 3
      %p253 = pnand %p251, %p252
      %p254 = pneg %p253
      // Predicated region
      $region25: #{tpu_custom_call.1} parent=5 // pred_check
        _
      $region26: #{tpu_custom_call.1} parent=5 // pred_check_branch
        %256 = sbr.rel (%p253) target = $region28
      $region27: #{tpu_custom_call.1} parent=5 // pred_region
        %s257 = ssub.s32 %s18, 1
        %s258 = sand.u32 %s45, 1
        %s259 = scalar_lea.sflag [#allocation3], %s258
        %s260 = sand.u32 %s45, 1
        %s261 = smul.addr %s260, 8
        %s262 = scalar_lea.vmem [#allocation2], %s261
        // Predicated region
        $region29: #{tpu_custom_call.1} parent=27 // pred_check
          %p263 = pneg %p58
        $region30: #{tpu_custom_call.1} parent=27 // pred_check_branch
          %265 = sbr.rel (%p263) target = $region32
        $region31: #{tpu_custom_call.1} parent=27 // pred_region
          %266 = dma.done %s259, 128
        $region32: #{tpu_custom_call.1} parent=27 // pred_fallthru
          _
        %s267 = sand.u32 %s73, 1
        %s268 = scalar_lea.sflag [#allocation5], %s267
        %s269 = sand.u32 %s73, 1
        %s270 = smul.addr %s269, 4
        %s271 = scalar_lea.vmem [#allocation4], %s270
        // Predicated region
        $region33: #{tpu_custom_call.1} parent=27 // pred_check
          %p272 = pneg %p86
        $region34: #{tpu_custom_call.1} parent=27 // pred_check_branch
          %274 = sbr.rel (%p272) target = $region36
        $region35: #{tpu_custom_call.1} parent=27 // pred_region
          %275 = dma.done %s268, 64
        $region36: #{tpu_custom_call.1} parent=27 // pred_fallthru
          _
        %s276 = sand.u32 %s45, 1
        %s277 = scalar_lea.sflag [#allocation3], %s276
        %s278 = sand.u32 %s45, 1
        %s279 = smul.addr %s278, 8
        %s280 = scalar_lea.vmem [#allocation2], %s279
        %p281 = pneg %p58
        %p282 = pneg %p55
        %s283 = sand.u32 %s73, 1
        %s284 = scalar_lea.sflag [#allocation5], %s283
        %s285 = sand.u32 %s73, 1
        %s286 = smul.addr %s285, 4
        %s287 = scalar_lea.vmem [#allocation4], %s286
        %p288 = pneg %p86
        %p289 = pneg %p83
        %p290 = pneg %p112
        %p291 = pneg %p109
        %p292 = scmp.lt.s32.totalorder %s27, 1
        %s293 = scalar_select %p292, %s27, 1
        %s294 = smul.addr %s293, 4
        %s295 = scalar_lea.vmem %s2, %s294
        %p296 = pneg %p138
        %p297 = pneg %p135
        %p298 = scmp.lt.s32.totalorder %s27, 1
        %s299 = scalar_select %p298, %s27, 1
        %s300 = smul.addr %s299, 4
        %s301 = scalar_lea.vmem %s3, %s300
        %p302 = pneg %p164
        %p303 = pneg %p161
        %p304 = scmp.lt.s32.totalorder %s27, 1
        %s305 = scalar_select %p304, %s27, 1
        %s306 = smul.addr %s305, 4
        %s307 = scalar_lea.vmem %s4, %s306
        %p308 = pneg %p190
        %p309 = pneg %p187
        %p310 = scmp.lt.s32.totalorder %s27, 1
        %s311 = scalar_select %p310, %s27, 1
        %s312 = smul.addr %s311, 4
        %s313 = scalar_lea.vmem %s5, %s312
        %s314 = smul.u32 2, %s28
        %s315 = smul.u32 2, %s28
        %p316 = scmp.lt.s32.totalorder %s27, 1
        %s317 = scalar_select %p316, %s27, 1
        %s318 = smul.addr %s317, 4
        %s319 = scalar_lea.vmem %s2, %s318
        %p320 = scmp.lt.s32.totalorder %s27, 1
        %s321 = scalar_select %p320, %s27, 1
        %s322 = smul.addr %s321, 4
        %s323 = scalar_lea.vmem %s3, %s322
        %p324 = scmp.lt.s32.totalorder %s27, 1
        %s325 = scalar_select %p324, %s27, 1
        %s326 = smul.addr %s325, 4
        %s327 = scalar_lea.vmem %s4, %s326
        %p328 = scmp.lt.s32.totalorder %s27, 1
        %s329 = scalar_select %p328, %s27, 1
        %s330 = smul.addr %s329, 4
        %s331 = scalar_lea.vmem %s5, %s330
        %p332 = scmp.eq.s32.totalorder %s28, 0
        // Predicated region
        $region37: #{tpu_custom_call.1} parent=27 // pred_check
          %p333 = pneg %p332
        $region38: #{tpu_custom_call.1} parent=27 // pred_check_branch
          %335 = sbr.rel (%p333) target = $region40
        $region39: #{tpu_custom_call.1} parent=27 // pred_region
          %vm336 = vcmask 3072
          %337 = vst.msk [vmem:[%s319] sm:$0xf] %vm336, 0.0
          %338 = vst.msk [vmem:[%s323] sm:$0xf] %vm336, 0.0
          %339 = vst.msk [vmem:[%s327] sm:$0xf] %vm336, 0.0
          %340 = vst.msk [vmem:[%s331] sm:$0xf] %vm336, 0.0
        $region40: #{tpu_custom_call.1} parent=27 // pred_fallthru
          _
        %v341 = vld [vmem:[%s262] sm:$0xff]
        %v342 = vld [vmem:[%s271] sm:$0xf]
        %v343 = vunpack.c.l.bf16 %v342
        %v344 = vand.u32 2147483647, %v341
        %v345 = vsub.f32 0.0, %v344
        %v346 = vmul.f32 %v345, 1.442695
        %v347 = vpow.pop %v346
        %vm348 = vcmp.ge.f32.partialorder %v341, 0.0
        %v349 = vsel %vm348, 1.0, %v347
        %v350 = vadd.f32 %v347, 1.0
        %v351 = vrcp.pop %v350
        %v352 = vmul.f32 %v349, %v351
        %v353 = vmax.f32 %v341, 0.0
        %v354 = vmul.f32 %v341, %v343
        %v355 = vsub.f32 %v353, %v354
        %v356 = vadd.f32 %v347, 1.0
        %v357 = vlog2.pop %v356
        %v358 = vmul.f32 %v357, 0.6931472
        %v359 = vmul.f32 -0.5, %v347
        %v360 = vadd.f32 %v359, 1.0
        %v361 = vmul.f32 %v360, %v347
        %v362 = vand.u32 2147483647, %v347
        %vm363 = vcmp.lt.f32.partialorder %v362, 0.0004427343
        %v364 = vsel %vm363, %v361, %v358
        %v365 = vadd.f32 %v355, %v364
        %v366 = vld [vmem:[%s319] sm:$0xf]
        %v367 = vmul.f32 %v352, %v343
        %v369 = vcombine.high %v367, %v367
        %vm371 = vcmask 1043456
        %v372 = vsel %vm371, %v367, 0.0
        %v373 = vsel %vm371, %v369, 0.0
        %v374 = vadd.f32 %v372, %v373
        %375 = vadd.xlane.f32.xlu0 %v374
        %v376 = vpop.xlane.xlu0 %375
        %v377 = vadd.f32 %v366, %v376
        %vm378 = vcmask 3072
        %379 = vst.msk [vmem:[%s319] sm:$0xf] %vm378, %v377
        %v380 = vld [vmem:[%s323] sm:$0xf]
        %v382 = vcombine.high %v352, %v352
        %v384 = vsel %vm371, %v352, 0.0
        %v385 = vsel %vm371, %v382, 0.0
        %v386 = vadd.f32 %v384, %v385
        %387 = vadd.xlane.f32.xlu0 %v386
        %v388 = vpop.xlane.xlu0 %387
        %v389 = vadd.f32 %v380, %v388
        %390 = vst.msk [vmem:[%s323] sm:$0xf] %vm378, %v389
        %v391 = vld [vmem:[%s327] sm:$0xf]
        %v393 = vcombine.high %v343, %v343
        %v395 = vsel %vm371, %v343, 0.0
        %v396 = vsel %vm371, %v393, 0.0
        %v397 = vadd.f32 %v395, %v396
        %398 = vadd.xlane.f32.xlu0 %v397
        %v399 = vpop.xlane.xlu0 %398
        %v400 = vadd.f32 %v391, %v399
        %401 = vst.msk [vmem:[%s327] sm:$0xf] %vm378, %v400
        %v402 = vld [vmem:[%s331] sm:$0xf]
        %v404 = vcombine.high %v365, %v365
        %v406 = vsel %vm371, %v365, 0.0
        %v407 = vsel %vm371, %v404, 0.0
        %v408 = vadd.f32 %v406, %v407
        %409 = vadd.xlane.f32.xlu0 %v408
        %v410 = vpop.xlane.xlu0 %409
        %v411 = vadd.f32 %v402, %v410
        %412 = vst.msk [vmem:[%s331] sm:$0xf] %vm378, %v411
        %p413 = scmp.lt.s32.totalorder %s27, 1
        %s414 = scalar_select %p413, %s27, 1
        %s415 = smul.addr %s414, 4
        %s416 = scalar_lea.vmem %s2, %s415
        %p417 = scmp.lt.s32.totalorder %s27, 1
        %s418 = scalar_select %p417, %s27, 1
        %s419 = smul.addr %s418, 4
        %s420 = scalar_lea.vmem %s3, %s419
        %p421 = scmp.lt.s32.totalorder %s27, 1
        %s422 = scalar_select %p421, %s27, 1
        %s423 = smul.addr %s422, 4
        %s424 = scalar_lea.vmem %s4, %s423
        %p425 = scmp.lt.s32.totalorder %s27, 1
        %s426 = scalar_select %p425, %s27, 1
        %s427 = smul.addr %s426, 4
        %s428 = scalar_lea.vmem %s5, %s427
        // Predicated region
        $region41: #{tpu_custom_call.1} parent=27 // pred_check
          %p429 = pneg %p109
        $region42: #{tpu_custom_call.1} parent=27 // pred_check_branch
          %431 = sbr.rel (%p429) target = $region44
        $region43: #{tpu_custom_call.1} parent=27 // pred_region
          _
        $region44: #{tpu_custom_call.1} parent=27 // pred_fallthru
          _
        // Predicated region
        $region45: #{tpu_custom_call.1} parent=27 // pred_check
          %p432 = pneg %p135
        $region46: #{tpu_custom_call.1} parent=27 // pred_check_branch
          %434 = sbr.rel (%p432) target = $region48
        $region47: #{tpu_custom_call.1} parent=27 // pred_region
          _
        $region48: #{tpu_custom_call.1} parent=27 // pred_fallthru
          _
        // Predicated region
        $region49: #{tpu_custom_call.1} parent=27 // pred_check
          %p435 = pneg %p161
        $region50: #{tpu_custom_call.1} parent=27 // pred_check_branch
          %437 = sbr.rel (%p435) target = $region52
        $region51: #{tpu_custom_call.1} parent=27 // pred_region
          _
        $region52: #{tpu_custom_call.1} parent=27 // pred_fallthru
          _
        // Predicated region
        $region53: #{tpu_custom_call.1} parent=27 // pred_check
          %p438 = pneg %p187
        $region54: #{tpu_custom_call.1} parent=27 // pred_check_branch
          %440 = sbr.rel (%p438) target = $region56
        $region55: #{tpu_custom_call.1} parent=27 // pred_region
          _
        $region56: #{tpu_custom_call.1} parent=27 // pred_fallthru
          _
      $region28: #{tpu_custom_call.1} parent=5 // pred_fallthru
        _
      %p441 = scmp.le.s32.totalorder 2, %s18
      // Predicated region
      $region57: #{tpu_custom_call.1} parent=5 // pred_check
        %p442 = pneg %p441
      $region58: #{tpu_custom_call.1} parent=5 // pred_check_branch
        %444 = sbr.rel (%p442) target = $region60
      $region59: #{tpu_custom_call.1} parent=5 // pred_region
        %s445 = ssub.s32 %s18, 2
        // Predicated region
        $region61: #{tpu_custom_call.1} parent=59 // pred_check
          %p446 = pneg %p115
        $region62: #{tpu_custom_call.1} parent=59 // pred_check_branch
          %448 = sbr.rel (%p446) target = $region64
        $region63: #{tpu_custom_call.1} parent=59 // pred_region
          %p449 = scmp.lt.s32.totalorder %s29, 1
          %s450 = scalar_select %p449, %s29, 1
          %s451 = smul.addr %s450, 4
          %s452 = scalar_lea.vmem %s2, %s451
        $region64: #{tpu_custom_call.1} parent=59 // pred_fallthru
          _
        // Predicated region
        $region65: #{tpu_custom_call.1} parent=59 // pred_check
          %p453 = pneg %p141
        $region66: #{tpu_custom_call.1} parent=59 // pred_check_branch
          %455 = sbr.rel (%p453) target = $region68
        $region67: #{tpu_custom_call.1} parent=59 // pred_region
          %p456 = scmp.lt.s32.totalorder %s29, 1
          %s457 = scalar_select %p456, %s29, 1
          %s458 = smul.addr %s457, 4
          %s459 = scalar_lea.vmem %s3, %s458
        $region68: #{tpu_custom_call.1} parent=59 // pred_fallthru
          _
        // Predicated region
        $region69: #{tpu_custom_call.1} parent=59 // pred_check
          %p460 = pneg %p167
        $region70: #{tpu_custom_call.1} parent=59 // pred_check_branch
          %462 = sbr.rel (%p460) target = $region72
        $region71: #{tpu_custom_call.1} parent=59 // pred_region
          %p463 = scmp.lt.s32.totalorder %s29, 1
          %s464 = scalar_select %p463, %s29, 1
          %s465 = smul.addr %s464, 4
          %s466 = scalar_lea.vmem %s4, %s465
        $region72: #{tpu_custom_call.1} parent=59 // pred_fallthru
          _
        // Predicated region
        $region73: #{tpu_custom_call.1} parent=59 // pred_check
          %p467 = pneg %p193
        $region74: #{tpu_custom_call.1} parent=59 // pred_check_branch
          %469 = sbr.rel (%p467) target = $region76
        $region75: #{tpu_custom_call.1} parent=59 // pred_region
          %p470 = scmp.lt.s32.totalorder %s29, 1
          %s471 = scalar_select %p470, %s29, 1
          %s472 = smul.addr %s471, 4
          %s473 = scalar_lea.vmem %s5, %s472
        $region76: #{tpu_custom_call.1} parent=59 // pred_fallthru
          _
      $region60: #{tpu_custom_call.1} parent=5 // pred_fallthru
        _
    $region6: #{tpu_custom_call.1} parent=1 // loop_footer
      %s22 = sadd.s32 1, %s18
    $region7: #{tpu_custom_call.1} parent=1 // loop_footer_branch
      %17 = sbr.rel target = $region3
    $region8: #{tpu_custom_call.1} parent=1 // loop_exit
      _
    %474 = vsyncpa [#allocation3], 1
    %s475 = scalar_lea.sflag [#allocation3], 1
    %476 = vsyncpa %s475, 1
    %477 = vsyncpa [#allocation5], 1
    %s478 = scalar_lea.sflag [#allocation5], 1
    %479 = vsyncpa %s478, 1

</llo_original>
